<compile_context>
chip_gen: v5e
topology: v5e:2x2
jax: 0.10.0
libtpu: 0.0.40
codegen_flags: <defaults>
</compile_context>

<pallas_src>
import math
from functools import partial

import numpy as np
import jax
import jax.numpy as jnp
from jax.experimental import pallas as pl
from jax.experimental.pallas import tpu as pltpu


_LANE = 128            # TPU lane width
_MAX_COLS = 1024       # lane-dense slab width cap (multiple of 128)
_MAX_TILE_BYTES = 2 << 20   # ~2 MiB/tile -> <= ~8 MiB resident with dbl-buffered in+out


def _copy_kernel(x_ref, o_ref):
    # Identity copy of the current (row-tile, lane-dense) block.
    o_ref[...] = x_ref[...]


def _sublane_multiple(dtype):
    # f32 -> 8, bf16 -> 16, int8/fp8 -> 32 (packed sublanes).
    itemsize = jnp.dtype(dtype).itemsize
    return 8 * max(1, 4 // itemsize)


def _slab_shape(n, dtype):
    """Pick (rows, cols) with rows * cols == n and cols lane-dense when possible."""
    del dtype
    if n % _LANE == 0:
        cols = _LANE
        for c in range(_LANE, min(n, _MAX_COLS) + 1, _LANE):
            if n % c == 0:
                cols = c
    else:
        # Tiny / irregular tail: single full-width row (full-block spec is legal).
        cols = n
    return n // cols, cols


def _row_tile(rows, cols, dtype):
    """Largest row tile that divides `rows`, is sublane-packed, and fits the VMEM budget."""
    sub = _sublane_multiple(dtype)
    itemsize = jnp.dtype(dtype).itemsize
    cap = max(sub, (_MAX_TILE_BYTES // max(1, cols * itemsize)) // sub * sub)
    best = None
    t = sub
    while t <= min(rows, cap):
        if rows % t == 0:
            best = t
        t += sub
    return best if best is not None else rows   # full dim is always a legal block


def _materialized_copy_2d(x2d):
    rows, cols = x2d.shape
    tb = _row_tile(rows, cols, x2d.dtype)
    tc = cols  # already capped at _MAX_COLS and a multiple of 128 when possible
    grid = (rows // tb, cols // tc)

    return pl.pallas_call(
        _copy_kernel,
        out_shape=jax.ShapeDtypeStruct((rows, cols), x2d.dtype),
        grid_spec=pltpu.PrefetchScalarGridSpec(
            num_scalar_prefetch=0,
            grid=grid,
            in_specs=[pl.BlockSpec((tb, tc), lambda i, j: (i, j))],
            out_specs=pl.BlockSpec((tb, tc), lambda i, j: (i, j)),
        ),
        compiler_params=pltpu.CompilerParams(
            dimension_semantics=("parallel", "parallel"),
            vmem_limit_bytes=64 << 20,
        ),
        # Reuse the input buffer for the output: no second full-size HBM alloc.
        input_output_aliases={0: 0},
    )(x2d)


@partial(jax.jit, static_argnames=("out_shape",))
def _materialized_reshape(x, out_shape):
    n = math.prod(x.shape)
    rows, cols = _slab_shape(n, x.dtype)
    x2d = jnp.reshape(x, (rows, cols))          # glue: metadata-only flatten
    y2d = _materialized_copy_2d(x2d)            # hot path: lane-dense identity copy
    return jnp.reshape(y2d, out_shape)          # glue: metadata-only unflatten


def reshape_pallas(x, shape, materialize=False):
    """Equivalent of torch Reshape(shape): x.view(x.shape[0], *shape).

    materialize=False (default): metadata-only jnp.reshape (review's top recommendation).
    materialize=True: force a copy through a tiled Pallas kernel.
    """
    b = x.shape[0]
    flat = math.prod(x.shape[1:]) if x.ndim > 1 else 1
    tgt_flat = math.prod(shape)
    assert flat == tgt_flat, f"cannot view {x.shape} as ({b}, {tuple(shape)})"
    out_shape = (b,) + tuple(shape)

    if not materialize:
        # Contiguous reshape is pure metadata: zero HBM traffic.
        return jnp.reshape(x, out_shape)
    return _materialized_reshape(x, out_shape)


if __name__ == "__main__":
    key = jax.random.PRNGKey(0)
    # Example consistent with a GAN conv pipeline: (batch, channels, H, W)
    B, C, H, W = 2, 4, 16, 16
    x = jax.random.normal(key, (B, C, H, W), dtype=jnp.float32)

    # Reshape module configured to view (C, H, W) = 1024 elems -> (8, 128)
    target_shape = (8, 128)

    expected = jnp.reshape(x, (B,) + target_shape)

    # Fast path (metadata-only).
    y_meta = jax.block_until_ready(reshape_pallas(x, target_shape, materialize=False))

    # Materializing Pallas copy kernel (lane-dense tiled identity copy).
    y_kern = jax.block_until_ready(reshape_pallas(x, target_shape, materialize=True))

    for y in (y_meta, y_kern):
        assert y.shape == (B,) + target_shape, y.shape
        assert y.dtype == x.dtype
        np.testing.assert_array_equal(np.asarray(y), np.asarray(expected))

    print("KERNEL_OK")
</pallas_src>

<mosaic_0001>
module attributes {stable_mosaic.version = 11 : i64} {
  func.func @_copy_kernel(%arg0: i32, %arg1: i32, %arg2: memref<2x1024xf32, #tpu.memory_space<vmem>>, %arg3: memref<2x1024xf32, #tpu.memory_space<vmem>>) attributes {dimension_semantics = [#tpu.dimension_semantics<parallel>, #tpu.dimension_semantics<parallel>], iteration_bounds = array<i64: 1, 1>, scalar_prefetch = 0 : i64, scratch_operands = 0 : i64, tpu.core_type = #tpu.core_type<tc>, window_params = [{transform_indices = @transform_0, window_bounds = array<i64: 2, 1024>}, {transform_indices = @transform_1, window_bounds = array<i64: 2, 1024>}]} {
    %c0 = arith.constant 0 : index
    %c0_0 = arith.constant 0 : index
    %0 = vector.load %arg2[%c0, %c0_0] : memref<2x1024xf32, #tpu.memory_space<vmem>>, vector<2x1024xf32>
    %c0_1 = arith.constant 0 : index
    %c0_2 = arith.constant 0 : index
    %1 = vector.load %arg3[%c0_1, %c0_2] : memref<2x1024xf32, #tpu.memory_space<vmem>>, vector<2x1024xf32>
    tpu.vector_store %arg3[%c0_1, %c0_2], %0 {strides = array<i32>} : memref<2x1024xf32, #tpu.memory_space<vmem>>, vector<2x1024xf32>,
    return
  }
  func.func @transform_0(%arg0: i32, %arg1: i32) -> (i32, i32) {
    %c0_i32 = arith.constant 0 : i32
    return %arg0, %arg1 : i32, i32
  }
  func.func @transform_1(%arg0: i32, %arg1: i32) -> (i32, i32) {
    %c0_i32 = arith.constant 0 : i32
    return %arg0, %arg1 : i32, i32
  }
}

</mosaic_0001>

<llo_original>
// kernel: _materialized_reshape.1
$region0: #{_materialized_reshape.1}
  #allocation0 [shape = 'u32[]', space=smem, size = 0x4, offset = 0x4, fixed_abs, tag = 'smem constant byte address 0x4 - core index']
  #allocation1 [shape = 'u32[72,128]{1,0:T(1,128)}', space=vmem, size = 0x9000, scoped, tag = 'internal scratch']
  %s0 = inlined_call_operand.vmem [shape: f32[2,1024], index: 0, kind: input, shape index: {}, may-alias: {0,1}]
  %s1 = inlined_call_operand.vmem [shape: f32[2,1024], index: 1, kind: output, shape index: {}, may-alias: {0,1}]
  %s2 = sld [smem:[#allocation0]]
  $region14: #{_materialized_reshape.1} parent=0
    _
  %s4 = ssub.s32 1, %s2
  %s5 = scalar_select 0, %s4, %s2
  // Predicated region
  $region2: #{_materialized_reshape.1} parent=0 // pred_check
    _
  $region3: #{_materialized_reshape.1} parent=0 // pred_check_branch
    %7 = sbr.rel (0) target = $region5
  $region4: #{_materialized_reshape.1} parent=0 // pred_region
    _
  $region5: #{_materialized_reshape.1} parent=0 // pred_fallthru
    _
  %v8 = vld [vmem:[%s0] sm:$0xff]
  %v9 = vld [vmem:[%s0 + $0x8] sm:$0xff]
  %10 = vst [vmem:[%s1] sm:$0xff] %v8
  %11 = vst [vmem:[%s1 + $0x8] sm:$0xff] %v9
  // Predicated region
  $region6: #{_materialized_reshape.1} parent=0 // pred_check
    _
  $region7: #{_materialized_reshape.1} parent=0 // pred_check_branch
    %13 = sbr.rel (0) target = $region9
  $region8: #{_materialized_reshape.1} parent=0 // pred_region
    _
  $region9: #{_materialized_reshape.1} parent=0 // pred_fallthru
    _
  // Predicated region
  $region10: #{_materialized_reshape.1} parent=0 // pred_check
    _
  $region11: #{_materialized_reshape.1} parent=0 // pred_check_branch
    %15 = sbr.rel (0) target = $region13
  $region12: #{_materialized_reshape.1} parent=0 // pred_region
    _
  $region13: #{_materialized_reshape.1} parent=0 // pred_fallthru
    _

</llo_original>
